<compile_context>
chip_gen: v7x
topology: tpu7x:2x2x1
jax: 0.10.0
libtpu: 0.0.40
codegen_flags: <defaults>
</compile_context>

<pallas_src>
import functools
import math

import jax
import jax.numpy as jnp
from jax.experimental import pallas as pl
from jax.experimental.pallas import tpu as pltpu


def _round_up(a, b):
    return (a + b - 1) // b * b


def _patch_embed_kernel(p_ref, w_ref, prm_ref, *rest, eps, pack):
    # p_ref:   (rp, pack*K)      packed im2col rows (compute dtype, e.g. bf16)
    # w_ref:   (pack*K, pack*E)  block-diagonal flattened conv weight
    # prm_ref: (3, pack*E)       rows = [conv bias, LN gamma, LN beta], each tiled pack x
    # avg_ref: (pack*E, pack*E)  hoisted block-diagonal 1/E averaging matrix (pack > 1)
    # o_ref:   (rp, pack*E)      lane-dense output: `pack` tokens per 128-lane row
    if pack > 1:
        avg_ref, o_ref = rest
    else:
        (o_ref,) = rest

    y = jnp.dot(p_ref[...], w_ref[...], preferred_element_type=jnp.float32)
    y = y + prm_ref[0:1, :]                                # conv bias (f32)

    if pack > 1:
        # Per-token mean / mean-of-squares in ONE MXU call: stack [y ; y*y] along
        # the sublane axis and multiply by the hoisted averaging matrix.  Operands
        # in compute dtype (bf16 on the fast path), f32 accumulation.
        rp = y.shape[0]
        stats_in = jnp.concatenate([y, y * y], axis=0).astype(avg_ref.dtype)
        stats = jnp.dot(stats_in, avg_ref[...], preferred_element_type=jnp.float32)
        mean, msq = stats[:rp, :], stats[rp:, :]
    else:
        mean = jnp.mean(y, axis=-1, keepdims=True)
        msq = jnp.mean(y * y, axis=-1, keepdims=True)

    var = jnp.maximum(msq - mean * mean, 0.0)              # single-pass variance
    y_hat = (y - mean) * jax.lax.rsqrt(var + eps)
    o_ref[...] = (y_hat * prm_ref[1:2, :] + prm_ref[2:3, :]).astype(o_ref.dtype)


def overlap_patch_embed(x, conv_w, conv_b, ln_w, ln_b, *, stride, eps=1e-5,
                        tm=2048, compute_dtype=jnp.bfloat16,
                        out_dtype=jnp.float32):
    """x: (B, C, H, W) NCHW. Returns (tokens, Hout, Wout),
    tokens: (B, Hout*Wout, embed_dim) in out_dtype (matches proj -> flatten -> LN)."""
    B, C, H, W = x.shape
    E, Cw, kh, kw = conv_w.shape
    assert Cw == C
    ph, pw = kh // 2, kw // 2
    sh = sw = stride
    Hout = (H + 2 * ph - kh) // sh + 1
    Wout = (W + 2 * pw - kw) // sw + 1
    K = C * kh * kw
    N = B * Hout * Wout

    # Tokens packed per 128-lane output row (lane-dense stores); 1 => no packing.
    pack = 128 // E if (E < 128 and 128 % E == 0) else 1
    pE, pK = pack * E, pack * K
    is_f32 = jnp.dtype(compute_dtype) == jnp.dtype(jnp.float32)

    # ---- patch extraction: single fused XLA op on NHWC; feature order is
    # channel-major (c*kh*kw + i*kw + j), matching conv_w.reshape(E, K).
    # One-hot filter => exact pass-through for bf16 operands at DEFAULT precision;
    # HIGHEST kept only on the f32 exactness-check path (perf irrelevant there).
    # TODO(synk): pull patch extraction fully into the kernel (manual row-strip DMA
    # with memory_space=pl.ANY) to also remove the intermediate (N, K) patch matrix.
    x_nhwc = jnp.transpose(x, (0, 2, 3, 1)).astype(compute_dtype)
    patches = jax.lax.conv_general_dilated_patches(
        x_nhwc, filter_shape=(kh, kw), window_strides=(sh, sw),
        padding=((ph, ph), (pw, pw)),
        dimension_numbers=("NHWC", "HWIO", "NHWC"),
        precision=(jax.lax.Precision.HIGHEST if is_f32
                   else jax.lax.Precision.DEFAULT))
    patches = patches.reshape(N, K)

    # Row tile: multiple of pack * sublane granule, capped by the (padded) N.
    sub = 8 if is_f32 else 16
    row_align = pack * sub
    tm_req = _round_up(max(tm, row_align), row_align)
    n_ceil = _round_up(N, row_align)
    tm_eff = min(tm_req, n_ceil)
    # v7x megacore: ensure >= 2 grid steps (so "parallel" splits across both
    # TensorCores) whenever the problem is big enough.  No-op on v5e/v6e (1 TC).
    if tm_eff == n_ceil and n_ceil >= 2 * row_align:
        tm_eff = _round_up(n_ceil // 2, row_align)
    N_pad = _round_up(N, tm_eff)
    if N_pad != N:
        patches = jnp.pad(patches, ((0, N_pad - N), (0, 0)))

    # Pack `pack` consecutive tokens per kernel row (host reshape = free relayout).
    Rp, rp = N_pad // pack, tm_eff // pack
    patches_p = patches.reshape(Rp, pK)

    # Block-diagonal flattened conv weight: the matmul itself emits the packed
    # lane-dense layout (no in-kernel relayout).
    w_mat = conv_w.reshape(E, K).T.astype(jnp.float32)                      # (K, E)
    if pack > 1:
        w_mat = jnp.kron(jnp.eye(pack, dtype=jnp.float32), w_mat)          # (pK, pE)
    w_big = w_mat.astype(compute_dtype)

    params = jnp.stack([jnp.tile(conv_b.astype(jnp.float32), pack),
                        jnp.tile(ln_w.astype(jnp.float32), pack),
                        jnp.tile(ln_b.astype(jnp.float32), pack)])          # (3, pE)

    in_specs = [
        pl.BlockSpec((rp, pK), lambda i: (i, 0)),    # packed patch rows (tiled)
        pl.BlockSpec((pK, pE), lambda i: (0, 0)),    # weight (VMEM-resident)
        pl.BlockSpec((3, pE), lambda i: (0, 0)),     # [bias; gamma; beta]
    ]
    args = [patches_p, w_big, params]
    if pack > 1:
        # Hoisted block-diagonal averaging matrix: avg[l, l2] = 1/E iff l//E == l2//E.
        # Built ONCE on the host (1/E is exact in bf16 for power-of-two E), stays
        # VMEM-resident via the constant index_map.
        g = jnp.arange(pE, dtype=jnp.int32) // E
        avg = ((g[:, None] == g[None, :]).astype(jnp.float32) / E).astype(compute_dtype)
        in_specs.append(pl.BlockSpec((pE, pE), lambda i: (0, 0)))
        args.append(avg)

    grid = (N_pad // tm_eff,)
    # VMEM footprint at tm=2048 / bf16 is ~2.5 MiB double-buffered — far below the
    # scoped defaults (16 MiB v5e / 32 MiB v6e,v7x), so no vmem_limit_bytes needed.
    out = pl.pallas_call(
        functools.partial(_patch_embed_kernel, eps=eps, pack=pack),
        out_shape=jax.ShapeDtypeStruct((Rp, pE), out_dtype),
        grid=grid,
        in_specs=in_specs,
        out_specs=pl.BlockSpec((rp, pE), lambda i: (i, 0)),
        compiler_params=pltpu.CompilerParams(
            dimension_semantics=("parallel",)),          # megacore-splittable grid
    )(*args)

    tokens = out.reshape(N_pad, E)[:N].reshape(B, Hout * Wout, E)
    return tokens, Hout, Wout


def _reference(x, conv_w, conv_b, ln_w, ln_b, *, stride, eps=1e-5):
    kh, kw = conv_w.shape[2], conv_w.shape[3]
    y = jax.lax.conv_general_dilated(
        x, conv_w, window_strides=(stride, stride),
        padding=((kh // 2, kh // 2), (kw // 2, kw // 2)),
        dimension_numbers=("NCHW", "OIHW", "NCHW"),
        precision=jax.lax.Precision.HIGHEST)
    y = y + conv_b[None, :, None, None]
    B, E, Ho, Wo = y.shape
    t = y.reshape(B, E, Ho * Wo).transpose(0, 2, 1)
    mean = t.mean(-1, keepdims=True)
    var = ((t - mean) ** 2).mean(-1, keepdims=True)
    t = (t - mean) / jnp.sqrt(var + eps)
    return t * ln_w + ln_b, Ho, Wo


if __name__ == "__main__":
    # Small config consistent with the module: img 16x16, patch 7, stride 4,
    # in_chans 3, embed_dim 32  ->  Hout = Wout = 4, 16 tokens per image.
    B, C, H, W = 2, 3, 16, 16
    patch_size, stride, embed_dim = 7, 4, 32

    key = jax.random.PRNGKey(0)
    kx, kw_ = jax.random.split(key, 2)
    x = jax.random.normal(kx, (B, C, H, W), dtype=jnp.float32)

    # Deterministic init mirroring _init_weights:
    #   Conv2d: normal(0, sqrt(2/fan_out)), bias zeros; LayerNorm: ones / zeros.
    fan_out = patch_size * patch_size * embed_dim
    conv_w = (jax.random.normal(kw_, (embed_dim, C, patch_size, patch_size),
                                dtype=jnp.float32)
              * math.sqrt(2.0 / fan_out))
    conv_b = jnp.zeros((embed_dim,), jnp.float32)
    ln_w = jnp.ones((embed_dim,), jnp.float32)
    ln_b = jnp.zeros((embed_dim,), jnp.float32)

    ref, Ho_r, Wo_r = _reference(x, conv_w, conv_b, ln_w, ln_b, stride=stride)

    # Exact-semantics check: f32 operands, tight tolerance.
    tok32, Ho, Wo = overlap_patch_embed(
        x, conv_w, conv_b, ln_w, ln_b, stride=stride, compute_dtype=jnp.float32)
    tok32 = jax.block_until_ready(tok32)
    assert (Ho, Wo) == (Ho_r, Wo_r)
    assert tok32.shape == (B, Ho * Wo, embed_dim)
    assert jnp.allclose(tok32, ref, atol=5e-4, rtol=5e-4), \
        float(jnp.max(jnp.abs(tok32 - ref)))

    # Fast path: bf16 MXU operands (f32 accumulation + f32 LayerNorm), looser tol.
    tok16, Ho2, Wo2 = overlap_patch_embed(
        x, conv_w, conv_b, ln_w, ln_b, stride=stride, compute_dtype=jnp.bfloat16)
    tok16 = jax.block_until_ready(tok16)
    assert (Ho2, Wo2) == (Ho, Wo)
    assert tok16.shape == (B, Ho * Wo, embed_dim)
    assert jnp.allclose(tok16, ref, atol=3e-2, rtol=3e-2), \
        float(jnp.max(jnp.abs(tok16 - ref)))

    # Fast path with bf16 output (halves the output HBM write).
    tok16o, Ho3, Wo3 = overlap_patch_embed(
        x, conv_w, conv_b, ln_w, ln_b, stride=stride,
        compute_dtype=jnp.bfloat16, out_dtype=jnp.bfloat16)
    tok16o = jax.block_until_ready(tok16o)
    assert (Ho3, Wo3) == (Ho, Wo)
    assert tok16o.dtype == jnp.bfloat16
    assert jnp.allclose(tok16o.astype(jnp.float32), ref, atol=3e-2, rtol=3e-2), \
        float(jnp.max(jnp.abs(tok16o.astype(jnp.float32) - ref)))

    print("KERNEL_OK")
</pallas_src>

<mosaic_0001>
module attributes {stable_mosaic.version = 11 : i64} {
  func.func @_patch_embed_kernel(%arg0: i32, %arg1: memref<8x588xf32, #tpu.memory_space<vmem>>, %arg2: memref<588x128xf32, #tpu.memory_space<vmem>>, %arg3: memref<3x128xf32, #tpu.memory_space<vmem>>, %arg4: memref<128x128xf32, #tpu.memory_space<vmem>>, %arg5: memref<8x128xf32, #tpu.memory_space<vmem>>) attributes {dimension_semantics = [#tpu.dimension_semantics<parallel>], iteration_bounds = array<i64: 1>, scalar_prefetch = 0 : i64, scratch_operands = 0 : i64, tpu.core_type = #tpu.core_type<tc>, window_params = [{transform_indices = @transform_0, window_bounds = array<i64: 8, 588>}, {pipeline_mode = #tpu.pipeline_mode<synchronous>, transform_indices = @transform_1, window_bounds = array<i64: 588, 128>}, {pipeline_mode = #tpu.pipeline_mode<synchronous>, transform_indices = @transform_2, window_bounds = array<i64: 3, 128>}, {pipeline_mode = #tpu.pipeline_mode<synchronous>, transform_indices = @transform_3, window_bounds = array<i64: 128, 128>}, {transform_indices = @transform_4, window_bounds = array<i64: 8, 128>}]} {
    %c0 = arith.constant 0 : index
    %c0_0 = arith.constant 0 : index
    %0 = vector.load %arg1[%c0, %c0_0] : memref<8x588xf32, #tpu.memory_space<vmem>>, vector<8x588xf32>
    %c0_1 = arith.constant 0 : index
    %c0_2 = arith.constant 0 : index
    %1 = vector.load %arg2[%c0_1, %c0_2] : memref<588x128xf32, #tpu.memory_space<vmem>>, vector<588x128xf32>
    %cst = arith.constant dense<0.000000e+00> : vector<8x128xf32>
    %2 = tpu.matmul %0, %1, %cst {dimension_numbers = #tpu.dot_dimension_numbers<[1], [0], [0], [1], [0, 0, 1, 1], [], []>} : vector<8x588xf32>, vector<588x128xf32>, vector<8x128xf32> -> vector<8x128xf32>
    %c0_3 = arith.constant 0 : index
    %c0_4 = arith.constant 0 : index
    %3 = vector.load %arg3[%c0_3, %c0_4] : memref<3x128xf32, #tpu.memory_space<vmem>>, vector<1x128xf32>
    %4 = vector.broadcast %3 : vector<1x128xf32> to vector<8x128xf32>
    %5 = arith.addf %2, %4 : vector<8x128xf32>
    %6 = arith.mulf %5, %5 : vector<8x128xf32>
    %7 = tpu.concatenate %5, %6 in 0 : vector<8x128xf32>, vector<8x128xf32> -> vector<16x128xf32>
    %c0_5 = arith.constant 0 : index
    %c0_6 = arith.constant 0 : index
    %8 = vector.load %arg4[%c0_5, %c0_6] : memref<128x128xf32, #tpu.memory_space<vmem>>, vector<128x128xf32>
    %cst_7 = arith.constant dense<0.000000e+00> : vector<16x128xf32>
    %9 = tpu.matmul %7, %8, %cst_7 {dimension_numbers = #tpu.dot_dimension_numbers<[1], [0], [0], [1], [0, 0, 1, 1], [], []>} : vector<16x128xf32>, vector<128x128xf32>, vector<16x128xf32> -> vector<16x128xf32>
    %10 = vector.extract_strided_slice %9 {offsets = [0, 0], sizes = [8, 128], strides = [1, 1]} : vector<16x128xf32> to vector<8x128xf32>
    %11 = vector.extract_strided_slice %9 {offsets = [8, 0], sizes = [8, 128], strides = [1, 1]} : vector<16x128xf32> to vector<8x128xf32>
    %12 = arith.mulf %10, %10 : vector<8x128xf32>
    %13 = arith.subf %11, %12 : vector<8x128xf32>
    %cst_8 = arith.constant 0.000000e+00 : f32
    %14 = vector.broadcast %cst_8 : f32 to vector<8x128xf32>
    %15 = arith.maximumf %13, %14 : vector<8x128xf32>
    %16 = arith.subf %5, %10 : vector<8x128xf32>
    %cst_9 = arith.constant 9.99999974E-6 : f32
    %17 = vector.broadcast %cst_9 : f32 to vector<8x128xf32>
    %18 = arith.addf %15, %17 : vector<8x128xf32>
    %19 = math.rsqrt %18 : vector<8x128xf32>
    %20 = arith.mulf %16, %19 : vector<8x128xf32>
    %c1 = arith.constant 1 : index
    %c0_10 = arith.constant 0 : index
    %21 = vector.load %arg3[%c1, %c0_10] : memref<3x128xf32, #tpu.memory_space<vmem>>, vector<1x128xf32>
    %22 = vector.broadcast %21 : vector<1x128xf32> to vector<8x128xf32>
    %23 = arith.mulf %20, %22 : vector<8x128xf32>
    %c2 = arith.constant 2 : index
    %c0_11 = arith.constant 0 : index
    %24 = vector.load %arg3[%c2, %c0_11] : memref<3x128xf32, #tpu.memory_space<vmem>>, vector<1x128xf32>
    %25 = vector.broadcast %24 : vector<1x128xf32> to vector<8x128xf32>
    %26 = arith.addf %23, %25 : vector<8x128xf32>
    %c0_12 = arith.constant 0 : index
    %c0_13 = arith.constant 0 : index
    %27 = vector.load %arg5[%c0_12, %c0_13] : memref<8x128xf32, #tpu.memory_space<vmem>>, vector<8x128xf32>
    tpu.vector_store %arg5[%c0_12, %c0_13], %26 {strides = array<i32>} : memref<8x128xf32, #tpu.memory_space<vmem>>, vector<8x128xf32>,
    return
  }
  func.func @transform_0(%arg0: i32) -> (i32, i32) {
    %c0_i32 = arith.constant 0 : i32
    %c0_i32_0 = arith.constant 0 : i32
    return %arg0, %c0_i32 : i32, i32
  }
  func.func @transform_1(%arg0: i32) -> (i32, i32) {
    %c0_i32 = arith.constant 0 : i32
    %c0_i32_0 = arith.constant 0 : i32
    %c0_i32_1 = arith.constant 0 : i32
    return %c0_i32, %c0_i32_0 : i32, i32
  }
  func.func @transform_2(%arg0: i32) -> (i32, i32) {
    %c0_i32 = arith.constant 0 : i32
    %c0_i32_0 = arith.constant 0 : i32
    %c0_i32_1 = arith.constant 0 : i32
    return %c0_i32, %c0_i32_0 : i32, i32
  }
  func.func @transform_3(%arg0: i32) -> (i32, i32) {
    %c0_i32 = arith.constant 0 : i32
    %c0_i32_0 = arith.constant 0 : i32
    %c0_i32_1 = arith.constant 0 : i32
    return %c0_i32, %c0_i32_0 : i32, i32
  }
  func.func @transform_4(%arg0: i32) -> (i32, i32) {
    %c0_i32 = arith.constant 0 : i32
    %c0_i32_0 = arith.constant 0 : i32
    return %arg0, %c0_i32 : i32, i32
  }
}

</mosaic_0001>

<llo_original>
// kernel: tpu_custom_call.1
$region0: #{tpu_custom_call.1}
  #allocation0 [shape = 'u32[]', space=smem, size = 0x4, offset = 0x4, fixed_abs, tag = 'smem constant byte address 0x4 - core index']
  #allocation1 [shape = 'u32[144,128]{1,0:T(1,128)}', space=vmem, size = 0x12000, scoped, tag = 'internal scratch']
  %s0 = inlined_call_operand.hbm [shape: f32[8,588], index: 0, kind: input, shape index: {}]
  %s1 = inlined_call_operand.hbm [shape: f32[588,128], index: 1, kind: input, shape index: {}]
  %s2 = inlined_call_operand.vmem [shape: f32[3,128], index: 2, kind: input, shape index: {}]
  %s3 = inlined_call_operand.hbm [shape: f32[128,128], index: 3, kind: input, shape index: {}]
  %s4 = inlined_call_operand.hbm [shape: f32[8,128], index: 4, kind: output, shape index: {}]
  %s5 = sld [smem:[#allocation0]]
  $region38: #{tpu_custom_call.1} parent=0
    _
  %s7 = ssub.s32 1, %s5
  %s8 = scalar_select 0, %s7, %s5
  $region1: #{tpu_custom_call.1} parent=0
    #allocation2 [shape = 'u8[20480]{0}', space=vmem, size = 0x5000, scoped, tag = 'input window, operand 0, single buffered']
    #allocation3 [shape = 's32[1]{0}', space=sflag, size = 0x4, scoped, tag = 'scoped memory for tpu_custom_call.1']
    #allocation4 [shape = 's32[1]{0}', space=sflag, size = 0x4, scoped, tag = 'scoped memory for tpu_custom_call.1']
    #allocation5 [shape = 'u8[303104]{0}', space=vmem, size = 0x4a000, scoped, tag = 'input window, operand 1, single buffered']
    #allocation6 [shape = 's32[1]{0}', space=sflag, size = 0x4, scoped, tag = 'scoped memory for tpu_custom_call.1']
    #allocation7 [shape = 'u8[65536]{0}', space=vmem, size = 0x10000, scoped, tag = 'input window, operand 3, single buffered']
    #allocation8 [shape = 'u8[4096]{0}', space=vmem, size = 0x1000, scoped, tag = 'output window, operand 0, single buffered']
    %9 = vsyncpa [#allocation3], 0
    %10 = vsyncpa [#allocation6], 0
    %11 = vsyncpa [#allocation4], 0
    // Predicated region
    $region2: #{tpu_custom_call.1} parent=1 // pred_check
      _
    $region3: #{tpu_custom_call.1} parent=1 // pred_check_branch
      %13 = sbr.rel (0) target = $region5
    $region4: #{tpu_custom_call.1} parent=1 // pred_region
      %s15 = ssub.s32 640, 640
      %16 = vsyncadd [#allocation3], %s15
      %s18 = sshll.u32 [#allocation2], 4
      %s19 = int_to_ptr.vmem [resolvable:$true] %s18
      %21 = dma.hbm_to_vmem [thread:$0]  %s0, 640, %s19, [#allocation3]
    $region5: #{tpu_custom_call.1} parent=1 // pred_fallthru
      _
    // Predicated region
    $region6: #{tpu_custom_call.1} parent=1 // pred_check
      _
    $region7: #{tpu_custom_call.1} parent=1 // pred_check_branch
      %23 = sbr.rel (0) target = $region9
    $region8: #{tpu_custom_call.1} parent=1 // pred_region
      %s25 = ssub.s32 9472, 9472
      %26 = vsyncadd [#allocation6], %s25
      %s27 = sshll.u32 [#allocation5], 4
      %s28 = int_to_ptr.vmem [resolvable:$true] %s27
      %33 = dma.hbm_to_vmem [thread:$0]  %s1, 9472, %s28, [#allocation6], 128, 128, 8
    $region9: #{tpu_custom_call.1} parent=1 // pred_fallthru
      _
    // Predicated region
    $region10: #{tpu_custom_call.1} parent=1 // pred_check
      _
    $region11: #{tpu_custom_call.1} parent=1 // pred_check_branch
      %35 = sbr.rel (0) target = $region13
    $region12: #{tpu_custom_call.1} parent=1 // pred_region
      _
    $region13: #{tpu_custom_call.1} parent=1 // pred_fallthru
      _
    // Predicated region
    $region14: #{tpu_custom_call.1} parent=1 // pred_check
      _
    $region15: #{tpu_custom_call.1} parent=1 // pred_check_branch
      %37 = sbr.rel (0) target = $region17
    $region16: #{tpu_custom_call.1} parent=1 // pred_region
      %s39 = ssub.s32 2048, 2048
      %40 = vsyncadd [#allocation6], %s39
      %s41 = sshll.u32 [#allocation7], 4
      %s42 = int_to_ptr.vmem [resolvable:$true] %s41
      %47 = dma.hbm_to_vmem [thread:$0]  %s3, 2048, %s42, [#allocation6], 128, 128, 8
    $region17: #{tpu_custom_call.1} parent=1 // pred_fallthru
      _
    // Predicated region
    $region18: #{tpu_custom_call.1} parent=1 // pred_check
      _
    $region19: #{tpu_custom_call.1} parent=1 // pred_check_branch
      %49 = sbr.rel (0) target = $region21
    $region20: #{tpu_custom_call.1} parent=1 // pred_region
      %50 = dma.done [#allocation3], 640
    $region21: #{tpu_custom_call.1} parent=1 // pred_fallthru
      _
    // Predicated region
    $region22: #{tpu_custom_call.1} parent=1 // pred_check
      _
    $region23: #{tpu_custom_call.1} parent=1 // pred_check_branch
      %52 = sbr.rel (0) target = $region25
    $region24: #{tpu_custom_call.1} parent=1 // pred_region
      %53 = dma.done [#allocation6], 9472
    $region25: #{tpu_custom_call.1} parent=1 // pred_fallthru
      _
    // Predicated region
    $region26: #{tpu_custom_call.1} parent=1 // pred_check
      _
    $region27: #{tpu_custom_call.1} parent=1 // pred_check_branch
      %55 = sbr.rel (0) target = $region29
    $region28: #{tpu_custom_call.1} parent=1 // pred_region
      %56 = dma.done [#allocation6], 2048
    $region29: #{tpu_custom_call.1} parent=1 // pred_fallthru
      _
    %v57 = vld [vmem:[#allocation2] sm:$0xff]
    %v58 = vld [vmem:[#allocation2 + $0x8] sm:$0xff]
    %v59 = vld [vmem:[#allocation2 + $0x10] sm:$0xff]
    %v60 = vld [vmem:[#allocation2 + $0x18] sm:$0xff]
    %v61 = vld [vmem:[#allocation2 + $0x20] sm:$0xff]
    %v62 = vld [vmem:[#allocation5] sm:$0xff]
    %v63 = vld [vmem:[#allocation5 + $0x8] sm:$0xff]
    %v64 = vld [vmem:[#allocation5 + $0x10] sm:$0xff]
    %v65 = vld [vmem:[#allocation5 + $0x18] sm:$0xff]
    %v66 = vld [vmem:[#allocation5 + $0x20] sm:$0xff]
    %v67 = vld [vmem:[#allocation5 + $0x28] sm:$0xff]
    %v68 = vld [vmem:[#allocation5 + $0x30] sm:$0xff]
    %v69 = vld [vmem:[#allocation5 + $0x38] sm:$0xff]
    %v70 = vld [vmem:[#allocation5 + $0x40] sm:$0xff]
    %v71 = vld [vmem:[#allocation5 + $0x48] sm:$0xff]
    %v72 = vld [vmem:[#allocation5 + $0x50] sm:$0xff]
    %v73 = vld [vmem:[#allocation5 + $0x58] sm:$0xff]
    %v74 = vld [vmem:[#allocation5 + $0x60] sm:$0xff]
    %v75 = vld [vmem:[#allocation5 + $0x68] sm:$0xff]
    %v76 = vld [vmem:[#allocation5 + $0x70] sm:$0xff]
    %v77 = vld [vmem:[#allocation5 + $0x78] sm:$0xff]
    %v78 = vld [vmem:[#allocation5 + $0x80] sm:$0xff]
    %v79 = vld [vmem:[#allocation5 + $0x88] sm:$0xff]
    %v80 = vld [vmem:[#allocation5 + $0x90] sm:$0xff]
    %v81 = vld [vmem:[#allocation5 + $0x98] sm:$0xff]
    %v82 = vld [vmem:[#allocation5 + $0xa0] sm:$0xff]
    %v83 = vld [vmem:[#allocation5 + $0xa8] sm:$0xff]
    %v84 = vld [vmem:[#allocation5 + $0xb0] sm:$0xff]
    %v85 = vld [vmem:[#allocation5 + $0xb8] sm:$0xff]
    %v86 = vld [vmem:[#allocation5 + $0xc0] sm:$0xff]
    %v87 = vld [vmem:[#allocation5 + $0xc8] sm:$0xff]
    %v88 = vld [vmem:[#allocation5 + $0xd0] sm:$0xff]
    %v89 = vld [vmem:[#allocation5 + $0xd8] sm:$0xff]
    %v90 = vld [vmem:[#allocation5 + $0xe0] sm:$0xff]
    %v91 = vld [vmem:[#allocation5 + $0xe8] sm:$0xff]
    %v92 = vld [vmem:[#allocation5 + $0xf0] sm:$0xff]
    %v93 = vld [vmem:[#allocation5 + $0xf8] sm:$0xff]
    %v94 = vld [vmem:[#allocation5 + $0x100] sm:$0xff]
    %v95 = vld [vmem:[#allocation5 + $0x108] sm:$0xff]
    %v96 = vld [vmem:[#allocation5 + $0x110] sm:$0xff]
    %v97 = vld [vmem:[#allocation5 + $0x118] sm:$0xff]
    %v98 = vld [vmem:[#allocation5 + $0x120] sm:$0xff]
    %v99 = vld [vmem:[#allocation5 + $0x128] sm:$0xff]
    %v100 = vld [vmem:[#allocation5 + $0x130] sm:$0xff]
    %v101 = vld [vmem:[#allocation5 + $0x138] sm:$0xff]
    %v102 = vld [vmem:[#allocation5 + $0x140] sm:$0xff]
    %v103 = vld [vmem:[#allocation5 + $0x148] sm:$0xff]
    %v104 = vld [vmem:[#allocation5 + $0x150] sm:$0xff]
    %v105 = vld [vmem:[#allocation5 + $0x158] sm:$0xff]
    %v106 = vld [vmem:[#allocation5 + $0x160] sm:$0xff]
    %v107 = vld [vmem:[#allocation5 + $0x168] sm:$0xff]
    %v108 = vld [vmem:[#allocation5 + $0x170] sm:$0xff]
    %v109 = vld [vmem:[#allocation5 + $0x178] sm:$0xff]
    %v110 = vld [vmem:[#allocation5 + $0x180] sm:$0xff]
    %v111 = vld [vmem:[#allocation5 + $0x188] sm:$0xff]
    %v112 = vld [vmem:[#allocation5 + $0x190] sm:$0xff]
    %v113 = vld [vmem:[#allocation5 + $0x198] sm:$0xff]
    %v114 = vld [vmem:[#allocation5 + $0x1a0] sm:$0xff]
    %v115 = vld [vmem:[#allocation5 + $0x1a8] sm:$0xff]
    %v116 = vld [vmem:[#allocation5 + $0x1b0] sm:$0xff]
    %v117 = vld [vmem:[#allocation5 + $0x1b8] sm:$0xff]
    %v118 = vld [vmem:[#allocation5 + $0x1c0] sm:$0xff]
    %v119 = vld [vmem:[#allocation5 + $0x1c8] sm:$0xff]
    %v120 = vld [vmem:[#allocation5 + $0x1d0] sm:$0xff]
    %v121 = vld [vmem:[#allocation5 + $0x1d8] sm:$0xff]
    %v122 = vld [vmem:[#allocation5 + $0x1e0] sm:$0xff]
    %v123 = vld [vmem:[#allocation5 + $0x1e8] sm:$0xff]
    %v124 = vld [vmem:[#allocation5 + $0x1f0] sm:$0xff]
    %v125 = vld [vmem:[#allocation5 + $0x1f8] sm:$0xff]
    %v126 = vld [vmem:[#allocation5 + $0x200] sm:$0xff]
    %v127 = vld [vmem:[#allocation5 + $0x208] sm:$0xff]
    %v128 = vld [vmem:[#allocation5 + $0x210] sm:$0xff]
    %v129 = vld [vmem:[#allocation5 + $0x218] sm:$0xff]
    %v130 = vld [vmem:[#allocation5 + $0x220] sm:$0xff]
    %v131 = vld [vmem:[#allocation5 + $0x228] sm:$0xff]
    %v132 = vld [vmem:[#allocation5 + $0x230] sm:$0xff]
    %v133 = vld [vmem:[#allocation5 + $0x238] sm:$0xff]
    %v134 = vld [vmem:[#allocation5 + $0x240] sm:$0xff]
    %v135 = vld [vmem:[#allocation5 + $0x248] sm:$0xf]
    %v136 = vld [vmem:[%s2] sm:$0x1]
    %v137 = vlaneseq
    %v138 = vshrl.u32 %v137, 7
    %v139 = vsub.s32 0, %v138
    %v140 = vrot.slane %v136, %v139
    %vm141 = vcmask 621568
    %v143 = vsel %vm141, %v61, 0
    %vm145 = vcmask 1043456
    %v147 = vsel %vm145, %v135, 0
    %149 = vmatprep.subr.mxu0 0.0
    %150 = vmatpush1.msra.mxu0 %v62
    %151 = vmatprep.subr.mxu0 0.0
    %152 = vmatpush1.msra.mxu0 %v63
    %153 = vmatprep.subr.mxu0 0.0
    %154 = vmatpush1.msra.mxu0 %v64
    %155 = vmatprep.subr.mxu0 0.0
    %156 = vmatpush1.msra.mxu0 %v65
    %157 = vmatprep.subr.mxu0 0.0
    %158 = vmatpush1.msra.mxu0 %v66
    %159 = vmatprep.subr.mxu0 0.0
    %160 = vmatpush1.msra.mxu0 %v67
    %161 = vmatprep.subr.mxu0 0.0
    %162 = vmatpush1.msra.mxu0 %v68
    %163 = vmatprep.subr.mxu0 0.0
    %164 = vmatpush1.msra.mxu0 %v69
    %165 = vmatprep.subr.mxu0 0.0
    %166 = vmatpush1.msra.mxu0 %v70
    %167 = vmatprep.subr.mxu0 0.0
    %168 = vmatpush1.msra.mxu0 %v71
    %169 = vmatprep.subr.mxu0 0.0
    %170 = vmatpush1.msra.mxu0 %v72
    %171 = vmatprep.subr.mxu0 0.0
    %172 = vmatpush1.msra.mxu0 %v73
    %173 = vmatprep.subr.mxu0 0.0
    %174 = vmatpush1.msra.mxu0 %v74
    %175 = vmatprep.subr.mxu0 0.0
    %176 = vmatpush1.msra.mxu0 %v75
    %177 = vmatprep.subr.mxu0 0.0
    %178 = vmatpush1.msra.mxu0 %v76
    %179 = vmatprep.subr.mxu0 0.0
    %180 = vmatpush1.msra.mxu0 %v77
    %181 = vmatprep.subr.mxu0 0.0
    %182 = vmatpush1.msra.mxu0 %v78
    %183 = vmatprep.subr.mxu0 0.0
    %184 = vmatpush1.msra.mxu0 %v79
    %185 = vmatprep.subr.mxu0 0.0
    %186 = vmatpush1.msra.mxu0 %v80
    %187 = vmatprep.subr.mxu0 0.0
    %188 = vmatpush1.msra.mxu0 %v81
    %189 = vmatprep.subr.mxu0 0.0
    %190 = vmatpush1.msra.mxu0 %v82
    %191 = vmatprep.subr.mxu0 0.0
    %192 = vmatpush1.msra.mxu0 %v83
    %193 = vmatprep.subr.mxu0 0.0
    %194 = vmatpush1.msra.mxu0 %v84
    %195 = vmatprep.subr.mxu0 0.0
    %196 = vmatpush1.msra.mxu0 %v85
    %197 = vmatprep.subr.mxu0 0.0
    %198 = vmatpush1.msra.mxu0 %v86
    %199 = vmatprep.subr.mxu0 0.0
    %200 = vmatpush1.msra.mxu0 %v87
    %201 = vmatprep.subr.mxu0 0.0
    %202 = vmatpush1.msra.mxu0 %v88
    %203 = vmatprep.subr.mxu0 0.0
    %204 = vmatpush1.msra.mxu0 %v89
    %205 = vmatprep.subr.mxu0 0.0
    %206 = vmatpush1.msra.mxu0 %v90
    %207 = vmatprep.subr.mxu0 0.0
    %208 = vmatpush1.msra.mxu0 %v91
    %209 = vmatprep.subr.mxu0 0.0
    %210 = vmatpush1.msra.mxu0 %v92
    %211 = vmatprep.subr.mxu0 0.0
    %212 = vmatpush1.msra.mxu0 %v93
    %213 = vmatprep.mubr.f32.mxu0 %v58
    %214 = vmatmul.mubr.f32.gmra.mrb[0].mxu0 %v57
    %v215 = vpop.f32.mrb[0].mxu0
    %v216 = vadd.f32 %v140, %v215
    %v217 = vpop.f32.mrb[0].mxu0
    %218 = vdwg.mxu0
    %219 = vmatprep.subr.mxu0 0.0
    %220 = vmatpush1.msra.mxu0 %v94
    %221 = vmatprep.subr.mxu0 0.0
    %222 = vmatpush1.msra.mxu0 %v95
    %223 = vmatprep.subr.mxu0 0.0
    %224 = vmatpush1.msra.mxu0 %v96
    %225 = vmatprep.subr.mxu0 0.0
    %226 = vmatpush1.msra.mxu0 %v97
    %227 = vmatprep.subr.mxu0 0.0
    %228 = vmatpush1.msra.mxu0 %v98
    %229 = vmatprep.subr.mxu0 0.0
    %230 = vmatpush1.msra.mxu0 %v99
    %231 = vmatprep.subr.mxu0 0.0
    %232 = vmatpush1.msra.mxu0 %v100
    %233 = vmatprep.subr.mxu0 0.0
    %234 = vmatpush1.msra.mxu0 %v101
    %235 = vmatprep.subr.mxu0 0.0
    %236 = vmatpush1.msra.mxu0 %v102
    %237 = vmatprep.subr.mxu0 0.0
    %238 = vmatpush1.msra.mxu0 %v103
    %239 = vmatprep.subr.mxu0 0.0
    %240 = vmatpush1.msra.mxu0 %v104
    %241 = vmatprep.subr.mxu0 0.0
    %242 = vmatpush1.msra.mxu0 %v105
    %243 = vmatprep.subr.mxu0 0.0
    %244 = vmatpush1.msra.mxu0 %v106
    %245 = vmatprep.subr.mxu0 0.0
    %246 = vmatpush1.msra.mxu0 %v107
    %247 = vmatprep.subr.mxu0 0.0
    %248 = vmatpush1.msra.mxu0 %v108
    %249 = vmatprep.subr.mxu0 0.0
    %250 = vmatpush1.msra.mxu0 %v109
    %251 = vmatprep.subr.mxu0 0.0
    %252 = vmatpush1.msra.mxu0 %v110
    %253 = vmatprep.subr.mxu0 0.0
    %254 = vmatpush1.msra.mxu0 %v111
    %255 = vmatprep.subr.mxu0 0.0
    %256 = vmatpush1.msra.mxu0 %v112
    %257 = vmatprep.subr.mxu0 0.0
    %258 = vmatpush1.msra.mxu0 %v113
    %259 = vmatprep.subr.mxu0 0.0
    %260 = vmatpush1.msra.mxu0 %v114
    %261 = vmatprep.subr.mxu0 0.0
    %262 = vmatpush1.msra.mxu0 %v115
    %263 = vmatprep.subr.mxu0 0.0
    %264 = vmatpush1.msra.mxu0 %v116
    %265 = vmatprep.subr.mxu0 0.0
    %266 = vmatpush1.msra.mxu0 %v117
    %267 = vmatprep.subr.mxu0 0.0
    %268 = vmatpush1.msra.mxu0 %v118
    %269 = vmatprep.subr.mxu0 0.0
    %270 = vmatpush1.msra.mxu0 %v119
    %271 = vmatprep.subr.mxu0 0.0
    %272 = vmatpush1.msra.mxu0 %v120
    %273 = vmatprep.subr.mxu0 0.0
    %274 = vmatpush1.msra.mxu0 %v121
    %275 = vmatprep.subr.mxu0 0.0
    %276 = vmatpush1.msra.mxu0 %v122
    %277 = vmatprep.subr.mxu0 0.0
    %278 = vmatpush1.msra.mxu0 %v123
    %279 = vmatprep.subr.mxu0 0.0
    %280 = vmatpush1.msra.mxu0 %v124
    %281 = vmatprep.subr.mxu0 0.0
    %282 = vmatpush1.msra.mxu0 %v125
    %283 = vmatprep.mubr.f32.mxu0 %v60
    %284 = vmatmul.mubr.f32.gmra.mrb[0].mxu0 %v59
    %v285 = vpop.f32.mrb[0].mxu0
    %v286 = vadd.f32 %v216, %v285
    %v287 = vpop.f32.mrb[0].mxu0
    %288 = vdwg.mxu0
    %289 = vmatprep.subr.mxu0 0.0
    %290 = vmatpush1.msra.mxu0 %v126
    %291 = vmatprep.subr.mxu0 0.0
    %292 = vmatpush1.msra.mxu0 %v127
    %293 = vmatprep.subr.mxu0 0.0
    %294 = vmatpush1.msra.mxu0 %v128
    %295 = vmatprep.subr.mxu0 0.0
    %296 = vmatpush1.msra.mxu0 %v129
    %297 = vmatprep.subr.mxu0 0.0
    %298 = vmatpush1.msra.mxu0 %v130
    %299 = vmatprep.subr.mxu0 0.0
    %300 = vmatpush1.msra.mxu0 %v131
    %301 = vmatprep.subr.mxu0 0.0
    %302 = vmatpush1.msra.mxu0 %v132
    %303 = vmatprep.subr.mxu0 0.0
    %304 = vmatpush1.msra.mxu0 %v133
    %305 = vmatprep.subr.mxu0 0.0
    %306 = vmatpush1.msra.mxu0 %v134
    %307 = vmatprep.subr.mxu0 0.0
    %308 = vmatpush1.msra.mxu0 %v147
    %309 = vmatprep.subr.mxu0 0.0
    %310 = vmatpush1.msra.mxu0 0.0
    %311 = vmatprep.subr.mxu0 0.0
    %312 = vmatpush1.msra.mxu0 0.0
    %313 = vmatprep.subr.mxu0 0.0
    %314 = vmatpush1.msra.mxu0 0.0
    %315 = vmatprep.subr.mxu0 0.0
    %316 = vmatpush1.msra.mxu0 0.0
    %317 = vmatprep.subr.mxu0 0.0
    %318 = vmatpush1.msra.mxu0 0.0
    %319 = vmatprep.subr.mxu0 0.0
    %320 = vmatpush1.msra.mxu0 0.0
    %321 = vmatprep.subr.mxu0 0.0
    %322 = vmatpush1.msra.mxu0 0.0
    %323 = vmatprep.subr.mxu0 0.0
    %324 = vmatpush1.msra.mxu0 0.0
    %325 = vmatprep.subr.mxu0 0.0
    %326 = vmatpush1.msra.mxu0 0.0
    %327 = vmatprep.subr.mxu0 0.0
    %328 = vmatpush1.msra.mxu0 0.0
    %329 = vmatprep.subr.mxu0 0.0
    %330 = vmatpush1.msra.mxu0 0.0
    %331 = vmatprep.subr.mxu0 0.0
    %332 = vmatpush1.msra.mxu0 0.0
    %333 = vmatprep.subr.mxu0 0.0
    %334 = vmatpush1.msra.mxu0 0.0
    %335 = vmatprep.subr.mxu0 0.0
    %336 = vmatpush1.msra.mxu0 0.0
    %337 = vmatprep.subr.mxu0 0.0
    %338 = vmatpush1.msra.mxu0 0.0
    %339 = vmatprep.subr.mxu0 0.0
    %340 = vmatpush1.msra.mxu0 0.0
    %341 = vmatprep.subr.mxu0 0.0
    %342 = vmatpush1.msra.mxu0 0.0
    %343 = vmatprep.subr.mxu0 0.0
    %344 = vmatpush1.msra.mxu0 0.0
    %345 = vmatprep.subr.mxu0 0.0
    %346 = vmatpush1.msra.mxu0 0.0
    %347 = vmatprep.subr.mxu0 0.0
    %348 = vmatpush1.msra.mxu0 0.0
    %349 = vmatprep.subr.mxu0 0.0
    %350 = vmatpush1.msra.mxu0 0.0
    %351 = vmatprep.subr.mxu0 0.0
    %352 = vmatpush1.msra.mxu0 0.0
    %353 = vmatprep.mubr.f32.mxu0 0.0
    %354 = vmatmul.mubr.f32.gmra.mrb[0].mxu0 %v143
    %v355 = vpop.f32.mrb[0].mxu0
    %v356 = vadd.f32 %v286, %v355
    %v357 = vpop.f32.mrb[0].mxu0
    %358 = vdwg.mxu0
    %v359 = vmul.f32 %v356, %v356
    %v360 = vld [vmem:[#allocation7] sm:$0xff]
    %v361 = vld [vmem:[#allocation7 + $0x8] sm:$0xff]
    %v362 = vld [vmem:[#allocation7 + $0x10] sm:$0xff]
    %v363 = vld [vmem:[#allocation7 + $0x18] sm:$0xff]
    %v364 = vld [vmem:[#allocation7 + $0x20] sm:$0xff]
    %v365 = vld [vmem:[#allocation7 + $0x28] sm:$0xff]
    %v366 = vld [vmem:[#allocation7 + $0x30] sm:$0xff]
    %v367 = vld [vmem:[#allocation7 + $0x38] sm:$0xff]
    %v368 = vld [vmem:[#allocation7 + $0x40] sm:$0xff]
    %v369 = vld [vmem:[#allocation7 + $0x48] sm:$0xff]
    %v370 = vld [vmem:[#allocation7 + $0x50] sm:$0xff]
    %v371 = vld [vmem:[#allocation7 + $0x58] sm:$0xff]
    %v372 = vld [vmem:[#allocation7 + $0x60] sm:$0xff]
    %v373 = vld [vmem:[#allocation7 + $0x68] sm:$0xff]
    %v374 = vld [vmem:[#allocation7 + $0x70] sm:$0xff]
    %v375 = vld [vmem:[#allocation7 + $0x78] sm:$0xff]
    %376 = vmatprep.subr.mxu0 0.0
    %377 = vmatpush1.msra.mxu0 %v360
    %378 = vmatprep.subr.mxu0 0.0
    %379 = vmatpush1.msra.mxu0 %v361
    %380 = vmatprep.subr.mxu0 0.0
    %381 = vmatpush1.msra.mxu0 %v362
    %382 = vmatprep.subr.mxu0 0.0
    %383 = vmatpush1.msra.mxu0 %v363
    %384 = vmatprep.subr.mxu0 0.0
    %385 = vmatpush1.msra.mxu0 %v364
    %386 = vmatprep.subr.mxu0 0.0
    %387 = vmatpush1.msra.mxu0 %v365
    %388 = vmatprep.subr.mxu0 0.0
    %389 = vmatpush1.msra.mxu0 %v366
    %390 = vmatprep.subr.mxu0 0.0
    %391 = vmatpush1.msra.mxu0 %v367
    %392 = vmatprep.subr.mxu0 0.0
    %393 = vmatpush1.msra.mxu0 %v368
    %394 = vmatprep.subr.mxu0 0.0
    %395 = vmatpush1.msra.mxu0 %v369
    %396 = vmatprep.subr.mxu0 0.0
    %397 = vmatpush1.msra.mxu0 %v370
    %398 = vmatprep.subr.mxu0 0.0
    %399 = vmatpush1.msra.mxu0 %v371
    %400 = vmatprep.subr.mxu0 0.0
    %401 = vmatpush1.msra.mxu0 %v372
    %402 = vmatprep.subr.mxu0 0.0
    %403 = vmatpush1.msra.mxu0 %v373
    %404 = vmatprep.subr.mxu0 0.0
    %405 = vmatpush1.msra.mxu0 %v374
    %406 = vmatprep.subr.mxu0 0.0
    %407 = vmatpush1.msra.mxu0 %v375
    %408 = vmatprep.subr.mxu0 0.0
    %409 = vmatpush1.msra.mxu0 0.0
    %410 = vmatprep.subr.mxu0 0.0
    %411 = vmatpush1.msra.mxu0 0.0
    %412 = vmatprep.subr.mxu0 0.0
    %413 = vmatpush1.msra.mxu0 0.0
    %414 = vmatprep.subr.mxu0 0.0
    %415 = vmatpush1.msra.mxu0 0.0
    %416 = vmatprep.subr.mxu0 0.0
    %417 = vmatpush1.msra.mxu0 0.0
    %418 = vmatprep.subr.mxu0 0.0
    %419 = vmatpush1.msra.mxu0 0.0
    %420 = vmatprep.subr.mxu0 0.0
    %421 = vmatpush1.msra.mxu0 0.0
    %422 = vmatprep.subr.mxu0 0.0
    %423 = vmatpush1.msra.mxu0 0.0
    %424 = vmatprep.subr.mxu0 0.0
    %425 = vmatpush1.msra.mxu0 0.0
    %426 = vmatprep.subr.mxu0 0.0
    %427 = vmatpush1.msra.mxu0 0.0
    %428 = vmatprep.subr.mxu0 0.0
    %429 = vmatpush1.msra.mxu0 0.0
    %430 = vmatprep.subr.mxu0 0.0
    %431 = vmatpush1.msra.mxu0 0.0
    %432 = vmatprep.subr.mxu0 0.0
    %433 = vmatpush1.msra.mxu0 0.0
    %434 = vmatprep.subr.mxu0 0.0
    %435 = vmatpush1.msra.mxu0 0.0
    %436 = vmatprep.subr.mxu0 0.0
    %437 = vmatpush1.msra.mxu0 0.0
    %438 = vmatprep.subr.mxu0 0.0
    %439 = vmatpush1.msra.mxu0 0.0
    %440 = vmatprep.mubr.f32.mxu0 0.0
    %441 = vmatmul.mubr.f32.gmra.mrb[0].mxu0 %v356
    %v442 = vpop.f32.mrb[0].mxu0
    %v443 = vadd.f32 0.0, %v442
    %v444 = vpop.f32.mrb[0].mxu0
    %445 = vmatprep.mubr.f32.mxu0 0.0
    %446 = vmatmul.mubr.f32.gmra.mrb[0].mxu0 %v359
    %v447 = vpop.f32.mrb[0].mxu0
    %v448 = vadd.f32 0.0, %v447
    %v449 = vpop.f32.mrb[0].mxu0
    %450 = vdwg.mxu0
    %v451 = vmul.f32 %v443, %v443
    %v452 = vsub.f32 %v448, %v451
    %v453 = vmax.f32 %v452, 0.0
    %v454 = vsub.f32 %v356, %v443
    %v455 = vadd.f32 %v453, 1e-05
    %v456 = vrsqrt.pop %v455
    %v457 = vmul.f32 %v454, %v456
    %v458 = vld [vmem:[%s2 + $0x1] sm:$0x1]
    %v459 = vlaneseq
    %v460 = vshrl.u32 %v459, 7
    %v461 = vsub.s32 0, %v460
    %v462 = vrot.slane %v458, %v461
    %v463 = vmul.f32 %v457, %v462
    %v464 = vld [vmem:[%s2 + $0x2] sm:$0x1]
    %v465 = vlaneseq
    %v466 = vshrl.u32 %v465, 7
    %v467 = vsub.s32 0, %v466
    %v468 = vrot.slane %v464, %v467
    %v469 = vadd.f32 %v463, %v468
    %470 = vst [vmem:[#allocation8] sm:$0xff] %v469
    // Predicated region
    $region30: #{tpu_custom_call.1} parent=1 // pred_check
      _
    $region31: #{tpu_custom_call.1} parent=1 // pred_check_branch
      %472 = sbr.rel (0) target = $region33
    $region32: #{tpu_custom_call.1} parent=1 // pred_region
      %s474 = ssub.s32 128, 128
      %475 = vsyncadd [#allocation4], %s474
      %s477 = sshll.u32 [#allocation8], 4
      %s478 = int_to_ptr.vmem [resolvable:$true] %s477
      %480 = dma.vmem_to_hbm [thread:$0]  %s478, 128, %s4, [#allocation4]
    $region33: #{tpu_custom_call.1} parent=1 // pred_fallthru
      _
    // Predicated region
    $region34: #{tpu_custom_call.1} parent=1 // pred_check
      _
    $region35: #{tpu_custom_call.1} parent=1 // pred_check_branch
      %482 = sbr.rel (0) target = $region37
    $region36: #{tpu_custom_call.1} parent=1 // pred_region
      %483 = dma.done [#allocation4], 128
    $region37: #{tpu_custom_call.1} parent=1 // pred_fallthru
      _
    %484 = vsyncpa [#allocation3], 1
    %485 = vsyncpa [#allocation6], 1
    %486 = vsyncpa [#allocation4], 1

</llo_original>
